<compile_context>
chip_gen: v6e
topology: v6e:2x2x1
jax: 0.10.0
libtpu: 0.0.40
codegen_flags: <defaults>
</compile_context>

<pallas_src>
import jax
import jax.numpy as jnp
from jax.experimental import pallas as pl
from jax.experimental.pallas import tpu as pltpu


LN_EPS = 1e-5


def _fused_ffn_kernel(x_ref, g_ref, bta_ref, w1_ref, b1_ref, w2_ref, b2_ref,
                      o_ref, x_sc, xn_sc, y_sc):
    """Grid = (row_tiles, experts, ffn_chunks).  Row-tile stays VMEM-resident."""
    e = pl.program_id(1)
    f = pl.program_id(2)
    n_e = pl.num_programs(1)
    n_f = pl.num_programs(2)

    # Load the activation row-tile once; it stays resident in VMEM (f32) across
    # all experts so the residual stream never round-trips HBM between layers.
    @pl.when((e == 0) & (f == 0))
    def _():
        x_sc[...] = x_ref[...].astype(jnp.float32)

    # Per-expert prologue: pre-LayerNorm (f32 VPU math) + zero fc2 accumulator.
    @pl.when(f == 0)
    def _():
        x = x_sc[...]
        mean = jnp.mean(x, axis=-1, keepdims=True)
        cen = x - mean
        var = jnp.mean(cen * cen, axis=-1, keepdims=True)
        xn = cen * jax.lax.rsqrt(var + LN_EPS)
        xn = xn * g_ref[0] + bta_ref[0]
        xn_sc[...] = xn.astype(jnp.bfloat16)   # cast once; bf16 MXU operand
        y_sc[...] = jnp.zeros_like(y_sc)

    # FFN chunk over F: fc1 (bf16 x bf16 -> f32) + relu, then fc2 accumulation.
    h = jnp.dot(xn_sc[...], w1_ref[0], preferred_element_type=jnp.float32)
    h = jnp.maximum(h + b1_ref[0], 0.0)
    y_sc[...] += jnp.dot(h.astype(jnp.bfloat16), w2_ref[0],
                         preferred_element_type=jnp.float32)

    # Per-expert epilogue: fc2 bias + residual back into the resident tile.
    @pl.when(f == n_f - 1)
    def _():
        x_sc[...] = x_sc[...] + y_sc[...] + b2_ref[0]

    # Single writeback after the last expert / last FFN chunk.
    @pl.when((e == n_e - 1) & (f == n_f - 1))
    def _():
        o_ref[...] = x_sc[...].astype(o_ref.dtype)


def _pick_tm(m, max_tm=256):
    return m if m <= max_tm else max_tm


def _pick_ft(f, max_ft=512):
    if f <= max_ft:
        return f
    ft = (max_ft // 128) * 128
    while ft >= 128:
        if f % ft == 0:
            return ft
        ft -= 128
    return f  # fallback: whole F as one chunk


def _vmem_bytes(tm, c, ft, x_bytes):
    wb = 2 * 2 * (c * ft) * 2           # w1 + w2 blocks (bf16), double-buffered
    bb = 2 * 4 * (ft + 3 * c)           # b1 + gamma/beta/b2 (f32), double-buffered
    io = 2 * tm * c * (2 * x_bytes)     # x in-block + out-block, double-buffered
    sc = tm * c * (4 + 2 + 4)           # x_sc f32, xn_sc bf16, y_sc f32
    hh = tm * ft * 4                    # fc1 intermediate
    return wb + bb + io + sc + hh


def nffn_forward(x, expert_params, *, max_tm=256, max_ft=512):
    """NFeedForwardNetwork.forward: n MoESublayers fused into ONE pallas_call."""
    B, T, C = x.shape
    M = B * T
    n = len(expert_params)

    # Stack per-expert params along a leading expert axis; weights in bf16.
    w1 = jnp.stack([p["w1"] for p in expert_params]).astype(jnp.bfloat16)   # (n, C, F)
    w2 = jnp.stack([p["w2"] for p in expert_params]).astype(jnp.bfloat16)   # (n, F, C)
    b1 = jnp.stack([p["b1"] for p in expert_params]).astype(jnp.float32)    # (n, 1, F)
    b2 = jnp.stack([p["b2"] for p in expert_params]).astype(jnp.float32)    # (n, 1, C)
    g = jnp.stack([p["ln_g"] for p in expert_params]).astype(jnp.float32)   # (n, 1, C)
    bta = jnp.stack([p["ln_b"] for p in expert_params]).astype(jnp.float32) # (n, 1, C)

    F = w1.shape[-1]
    x2d = x.reshape(M, C)

    tm = _pick_tm(M, max_tm)
    ft = _pick_ft(F, max_ft)
    xb = jnp.dtype(x.dtype).itemsize
    # Shrink the row tile if the VMEM budget would be exceeded (v7x: 64 MiB).
    while tm >= 32 and tm % 16 == 0 and _vmem_bytes(tm, C, ft, xb) > 48 * 2**20:
        tm //= 2

    grid = (pl.cdiv(M, tm), n, F // ft)
    vmem_limit = min(64 * 2**20,
                     max(32 * 2**20, int(1.5 * _vmem_bytes(tm, C, ft, xb))))

    out = pl.pallas_call(
        _fused_ffn_kernel,
        out_shape=jax.ShapeDtypeStruct((M, C), x.dtype),
        grid_spec=pltpu.PrefetchScalarGridSpec(
            num_scalar_prefetch=0,
            grid=grid,
            in_specs=[
                pl.BlockSpec((tm, C), lambda i, e, f: (i, 0)),        # x rows
                pl.BlockSpec((1, 1, C), lambda i, e, f: (e, 0, 0)),   # ln gamma
                pl.BlockSpec((1, 1, C), lambda i, e, f: (e, 0, 0)),   # ln beta
                pl.BlockSpec((1, C, ft), lambda i, e, f: (e, 0, f)),  # fc1 W (in,out)
                pl.BlockSpec((1, 1, ft), lambda i, e, f: (e, 0, f)),  # fc1 bias
                pl.BlockSpec((1, ft, C), lambda i, e, f: (e, f, 0)),  # fc2 W (in,out)
                pl.BlockSpec((1, 1, C), lambda i, e, f: (e, 0, 0)),   # fc2 bias
            ],
            out_specs=pl.BlockSpec((tm, C), lambda i, e, f: (i, 0)),
            scratch_shapes=[
                pltpu.VMEM((tm, C), jnp.float32),   # resident residual stream
                pltpu.VMEM((tm, C), jnp.bfloat16),  # layernormed MXU operand
                pltpu.VMEM((tm, C), jnp.float32),   # fc2 accumulator
            ],
        ),
        compiler_params=pltpu.CompilerParams(
            dimension_semantics=("parallel", "arbitrary", "arbitrary"),
            vmem_limit_bytes=vmem_limit,
        ),
    )(x2d, g, bta, w1, b1, w2, b2)
    return out.reshape(B, T, C)


def init_sublayer_params(key, embed_dim, ffn_dim, dtype=jnp.float32,
                         zero_fc2=True):
    """Shapes/init matching the torch module (fc2.weight zero-initialized)."""
    k1, k2, k3, k4 = jax.random.split(key, 4)
    bound1 = 1.0 / (embed_dim ** 0.5)
    bound2 = 1.0 / (ffn_dim ** 0.5)
    if zero_fc2:
        w2 = jnp.zeros((ffn_dim, embed_dim), dtype)          # fc2.weight.data.zero_()
    else:
        w2 = jax.random.uniform(k4, (ffn_dim, embed_dim), dtype, -bound2, bound2)
    return {
        "ln_g": jnp.ones((1, embed_dim), dtype),
        "ln_b": jnp.zeros((1, embed_dim), dtype),
        # stored transposed: (in, out)
        "w1": jax.random.uniform(k1, (embed_dim, ffn_dim), dtype, -bound1, bound1),
        "b1": jax.random.uniform(k2, (1, ffn_dim), dtype, -bound1, bound1),
        "w2": w2,
        "b2": jax.random.uniform(k3, (1, embed_dim), dtype, -bound2, bound2),
    }


def reference_forward(x, expert_params):
    """Pure-JAX f32 reference of the torch forward (eval mode, pre-norm)."""
    B, T, C = x.shape
    xs = x.reshape(B * T, C).astype(jnp.float32)
    for p in expert_params:
        residual = xs
        mean = jnp.mean(xs, axis=-1, keepdims=True)
        var = jnp.mean((xs - mean) ** 2, axis=-1, keepdims=True)
        h = (xs - mean) / jnp.sqrt(var + LN_EPS) * p["ln_g"] + p["ln_b"]
        h = jnp.maximum(h @ p["w1"] + p["b1"], 0.0)
        h = h @ p["w2"] + p["b2"]
        xs = residual + h
    return xs.reshape(B, T, C)


if __name__ == "__main__":
    # Small but lane-dense shapes (C, F multiples of 128).
    B, T, C, FFN, N_EXPERTS = 2, 8, 128, 256, 2

    key = jax.random.PRNGKey(0)
    kx, kp1, kp2 = jax.random.split(key, 3)
    x = jax.random.normal(kx, (B, T, C), jnp.float32)

    # Case 1: spec-faithful init (fc2 weight zeroed, as in MoESublayer.__init__).
    params_zero = [init_sublayer_params(ek, C, FFN, zero_fc2=True)
                   for ek in jax.random.split(kp1, N_EXPERTS)]
    out1 = jax.block_until_ready(nffn_forward(x, params_zero))
    ref1 = reference_forward(x, params_zero)
    assert out1.shape == (B, T, C)
    assert jnp.allclose(out1, ref1, atol=3e-2, rtol=3e-2), "mismatch (zero fc2)"

    # Case 2: nonzero fc2 weights ("trained" state) to exercise the full path.
    params_rand = [init_sublayer_params(ek, C, FFN, zero_fc2=False)
                   for ek in jax.random.split(kp2, N_EXPERTS)]
    out2 = jax.block_until_ready(nffn_forward(x, params_rand))
    ref2 = reference_forward(x, params_rand)
    assert jnp.allclose(out2, ref2, atol=3e-2, rtol=3e-2), "mismatch (rand fc2)"

    print("KERNEL_OK")
</pallas_src>

<mosaic_0001>
module attributes {stable_mosaic.version = 11 : i64} {
  func.func @_fused_ffn_kernel(%arg0: i32, %arg1: i32, %arg2: i32, %arg3: memref<16x128xf32, #tpu.memory_space<vmem>>, %arg4: memref<1x1x128xf32, #tpu.memory_space<vmem>>, %arg5: memref<1x1x128xf32, #tpu.memory_space<vmem>>, %arg6: memref<1x128x256xbf16, #tpu.memory_space<vmem>>, %arg7: memref<1x1x256xf32, #tpu.memory_space<vmem>>, %arg8: memref<1x256x128xbf16, #tpu.memory_space<vmem>>, %arg9: memref<1x1x128xf32, #tpu.memory_space<vmem>>, %arg10: memref<16x128xf32, #tpu.memory_space<vmem>>, %arg11: memref<16x128xf32, #tpu.memory_space<vmem>>, %arg12: memref<16x128xbf16, #tpu.memory_space<vmem>>, %arg13: memref<16x128xf32, #tpu.memory_space<vmem>>) attributes {dimension_semantics = [#tpu.dimension_semantics<parallel>, #tpu.dimension_semantics<arbitrary>, #tpu.dimension_semantics<arbitrary>], iteration_bounds = array<i64: 1, 2, 1>, scalar_prefetch = 0 : i64, scratch_operands = 3 : i64, tpu.core_type = #tpu.core_type<tc>, window_params = [{transform_indices = @transform_0, window_bounds = array<i64: 16, 128>}, {transform_indices = @transform_1, window_bounds = array<i64: 1, 1, 128>}, {transform_indices = @transform_2, window_bounds = array<i64: 1, 1, 128>}, {transform_indices = @transform_3, window_bounds = array<i64: 1, 128, 256>}, {transform_indices = @transform_4, window_bounds = array<i64: 1, 1, 256>}, {transform_indices = @transform_5, window_bounds = array<i64: 1, 256, 128>}, {transform_indices = @transform_6, window_bounds = array<i64: 1, 1, 128>}, {transform_indices = @transform_7, window_bounds = array<i64: 16, 128>}]} {
    %c0_i32 = arith.constant 0 : i32
    %0 = arith.cmpi eq, %arg1, %c0_i32 : i32
    %c0_i32_0 = arith.constant 0 : i32
    %1 = arith.cmpi eq, %arg2, %c0_i32_0 : i32
    %2 = arith.andi %0, %1 : i1
    %3 = arith.extui %2 : i1 to i32
    %c0_i32_1 = arith.constant 0 : i32
    %4 = arith.cmpi ne, %3, %c0_i32_1 : i32
    scf.if %4 {
      %c0_24 = arith.constant 0 : index
      %c0_25 = arith.constant 0 : index
      %33 = vector.load %arg3[%c0_24, %c0_25] : memref<16x128xf32, #tpu.memory_space<vmem>>, vector<16x128xf32>
      %c0_26 = arith.constant 0 : index
      %c0_27 = arith.constant 0 : index
      %34 = vector.load %arg11[%c0_26, %c0_27] : memref<16x128xf32, #tpu.memory_space<vmem>>, vector<16x128xf32>
      tpu.vector_store %arg11[%c0_26, %c0_27], %33 {strides = array<i32>} : memref<16x128xf32, #tpu.memory_space<vmem>>, vector<16x128xf32>,
    } else {
    }
    %c0_i32_2 = arith.constant 0 : i32
    %5 = arith.cmpi eq, %arg2, %c0_i32_2 : i32
    %6 = arith.extui %5 : i1 to i32
    %c0_i32_3 = arith.constant 0 : i32
    %7 = arith.cmpi ne, %6, %c0_i32_3 : i32
    scf.if %7 {
      %c0_24 = arith.constant 0 : index
      %c0_25 = arith.constant 0 : index
      %33 = vector.load %arg11[%c0_24, %c0_25] : memref<16x128xf32, #tpu.memory_space<vmem>>, vector<16x128xf32>
      %cst_26 = arith.constant dense<0.000000e+00> : vector<16xf32>
      %34 = vector.multi_reduction <add>, %33, %cst_26 [1] : vector<16x128xf32> to vector<16xf32>
      %35 = vector.shape_cast %34 : vector<16xf32> to vector<16x1xf32>
      %cst_27 = arith.constant 1.280000e+02 : f32
      %36 = vector.broadcast %cst_27 : f32 to vector<16x1xf32>
      %37 = arith.divf %35, %36 : vector<16x1xf32>
      %38 = vector.broadcast %37 : vector<16x1xf32> to vector<16x128xf32>
      %39 = arith.subf %33, %38 : vector<16x128xf32>
      %40 = arith.mulf %39, %39 : vector<16x128xf32>
      %cst_28 = arith.constant dense<0.000000e+00> : vector<16xf32>
      %41 = vector.multi_reduction <add>, %40, %cst_28 [1] : vector<16x128xf32> to vector<16xf32>
      %42 = vector.shape_cast %41 : vector<16xf32> to vector<16x1xf32>
      %cst_29 = arith.constant 1.280000e+02 : f32
      %43 = vector.broadcast %cst_29 : f32 to vector<16x1xf32>
      %44 = arith.divf %42, %43 : vector<16x1xf32>
      %cst_30 = arith.constant 9.99999974E-6 : f32
      %45 = vector.broadcast %cst_30 : f32 to vector<16x1xf32>
      %46 = arith.addf %44, %45 : vector<16x1xf32>
      %47 = math.rsqrt %46 : vector<16x1xf32>
      %48 = vector.broadcast %47 : vector<16x1xf32> to vector<16x128xf32>
      %49 = arith.mulf %39, %48 : vector<16x128xf32>
      %c0_31 = arith.constant 0 : index
      %c0_32 = arith.constant 0 : index
      %c0_33 = arith.constant 0 : index
      %50 = vector.load %arg4[%c0_31, %c0_32, %c0_33] : memref<1x1x128xf32, #tpu.memory_space<vmem>>, vector<1x1x128xf32>
      %51 = vector.shape_cast %50 : vector<1x1x128xf32> to vector<1x128xf32>
      %52 = vector.broadcast %51 : vector<1x128xf32> to vector<16x128xf32>
      %53 = arith.mulf %49, %52 : vector<16x128xf32>
      %c0_34 = arith.constant 0 : index
      %c0_35 = arith.constant 0 : index
      %c0_36 = arith.constant 0 : index
      %54 = vector.load %arg5[%c0_34, %c0_35, %c0_36] : memref<1x1x128xf32, #tpu.memory_space<vmem>>, vector<1x1x128xf32>
      %55 = vector.shape_cast %54 : vector<1x1x128xf32> to vector<1x128xf32>
      %56 = vector.broadcast %55 : vector<1x128xf32> to vector<16x128xf32>
      %57 = arith.addf %53, %56 : vector<16x128xf32>
      %58 = arith.truncf %57 : vector<16x128xf32> to vector<16x128xbf16>
      %c0_37 = arith.constant 0 : index
      %c0_38 = arith.constant 0 : index
      %59 = vector.load %arg12[%c0_37, %c0_38] : memref<16x128xbf16, #tpu.memory_space<vmem>>, vector<16x128xbf16>
      tpu.vector_store %arg12[%c0_37, %c0_38], %58 {strides = array<i32>} : memref<16x128xbf16, #tpu.memory_space<vmem>>, vector<16x128xbf16>,
      %cst_39 = arith.constant 0.000000e+00 : f32
      %60 = vector.broadcast %cst_39 : f32 to vector<16x128xf32>
      %c0_40 = arith.constant 0 : index
      %c0_41 = arith.constant 0 : index
      %61 = vector.load %arg13[%c0_40, %c0_41] : memref<16x128xf32, #tpu.memory_space<vmem>>, vector<16x128xf32>
      tpu.vector_store %arg13[%c0_40, %c0_41], %60 {strides = array<i32>} : memref<16x128xf32, #tpu.memory_space<vmem>>, vector<16x128xf32>,
    } else {
    }
    %c0 = arith.constant 0 : index
    %c0_4 = arith.constant 0 : index
    %8 = vector.load %arg12[%c0, %c0_4] : memref<16x128xbf16, #tpu.memory_space<vmem>>, vector<16x128xbf16>
    %c0_5 = arith.constant 0 : index
    %c0_6 = arith.constant 0 : index
    %c0_7 = arith.constant 0 : index
    %9 = vector.load %arg6[%c0_5, %c0_6, %c0_7] : memref<1x128x256xbf16, #tpu.memory_space<vmem>>, vector<1x128x256xbf16>
    %10 = vector.shape_cast %9 : vector<1x128x256xbf16> to vector<128x256xbf16>
    %cst = arith.constant dense<0.000000e+00> : vector<16x256xf32>
    %11 = tpu.matmul %8, %10, %cst {dimension_numbers = #tpu.dot_dimension_numbers<[1], [0], [0], [1], [0, 0, 1, 1], [], []>} : vector<16x128xbf16>, vector<128x256xbf16>, vector<16x256xf32> -> vector<16x256xf32>
    %c0_8 = arith.constant 0 : index
    %c0_9 = arith.constant 0 : index
    %c0_10 = arith.constant 0 : index
    %12 = vector.load %arg7[%c0_8, %c0_9, %c0_10] : memref<1x1x256xf32, #tpu.memory_space<vmem>>, vector<1x1x256xf32>
    %13 = vector.shape_cast %12 : vector<1x1x256xf32> to vector<1x256xf32>
    %14 = vector.broadcast %13 : vector<1x256xf32> to vector<16x256xf32>
    %15 = arith.addf %11, %14 : vector<16x256xf32>
    %cst_11 = arith.constant 0.000000e+00 : f32
    %16 = vector.broadcast %cst_11 : f32 to vector<16x256xf32>
    %17 = arith.maximumf %15, %16 : vector<16x256xf32>
    %c0_12 = arith.constant 0 : index
    %c0_13 = arith.constant 0 : index
    %18 = vector.load %arg13[%c0_12, %c0_13] : memref<16x128xf32, #tpu.memory_space<vmem>>, vector<16x128xf32>
    %19 = arith.truncf %17 : vector<16x256xf32> to vector<16x256xbf16>
    %c0_14 = arith.constant 0 : index
    %c0_15 = arith.constant 0 : index
    %c0_16 = arith.constant 0 : index
    %20 = vector.load %arg8[%c0_14, %c0_15, %c0_16] : memref<1x256x128xbf16, #tpu.memory_space<vmem>>, vector<1x256x128xbf16>
    %21 = vector.shape_cast %20 : vector<1x256x128xbf16> to vector<256x128xbf16>
    %cst_17 = arith.constant dense<0.000000e+00> : vector<16x128xf32>
    %22 = tpu.matmul %19, %21, %cst_17 {dimension_numbers = #tpu.dot_dimension_numbers<[1], [0], [0], [1], [0, 0, 1, 1], [], []>} : vector<16x256xbf16>, vector<256x128xbf16>, vector<16x128xf32> -> vector<16x128xf32>
    %23 = arith.addf %18, %22 : vector<16x128xf32>
    %c0_18 = arith.constant 0 : index
    %c0_19 = arith.constant 0 : index
    %24 = vector.load %arg13[%c0_18, %c0_19] : memref<16x128xf32, #tpu.memory_space<vmem>>, vector<16x128xf32>
    tpu.vector_store %arg13[%c0_18, %c0_19], %23 {strides = array<i32>} : memref<16x128xf32, #tpu.memory_space<vmem>>, vector<16x128xf32>,
    %c0_i32_20 = arith.constant 0 : i32
    %25 = arith.cmpi eq, %arg2, %c0_i32_20 : i32
    %26 = arith.extui %25 : i1 to i32
    %c0_i32_21 = arith.constant 0 : i32
    %27 = arith.cmpi ne, %26, %c0_i32_21 : i32
    scf.if %27 {
      %c0_24 = arith.constant 0 : index
      %c0_25 = arith.constant 0 : index
      %33 = vector.load %arg11[%c0_24, %c0_25] : memref<16x128xf32, #tpu.memory_space<vmem>>, vector<16x128xf32>
      %c0_26 = arith.constant 0 : index
      %c0_27 = arith.constant 0 : index
      %34 = vector.load %arg13[%c0_26, %c0_27] : memref<16x128xf32, #tpu.memory_space<vmem>>, vector<16x128xf32>
      %35 = arith.addf %33, %34 : vector<16x128xf32>
      %c0_28 = arith.constant 0 : index
      %c0_29 = arith.constant 0 : index
      %c0_30 = arith.constant 0 : index
      %36 = vector.load %arg9[%c0_28, %c0_29, %c0_30] : memref<1x1x128xf32, #tpu.memory_space<vmem>>, vector<1x1x128xf32>
      %37 = vector.shape_cast %36 : vector<1x1x128xf32> to vector<1x128xf32>
      %38 = vector.broadcast %37 : vector<1x128xf32> to vector<16x128xf32>
      %39 = arith.addf %35, %38 : vector<16x128xf32>
      %c0_31 = arith.constant 0 : index
      %c0_32 = arith.constant 0 : index
      %40 = vector.load %arg11[%c0_31, %c0_32] : memref<16x128xf32, #tpu.memory_space<vmem>>, vector<16x128xf32>
      tpu.vector_store %arg11[%c0_31, %c0_32], %39 {strides = array<i32>} : memref<16x128xf32, #tpu.memory_space<vmem>>, vector<16x128xf32>,
    } else {
    }
    %c1_i32 = arith.constant 1 : i32
    %28 = arith.cmpi eq, %arg1, %c1_i32 : i32
    %c0_i32_22 = arith.constant 0 : i32
    %29 = arith.cmpi eq, %arg2, %c0_i32_22 : i32
    %30 = arith.andi %28, %29 : i1
    %31 = arith.extui %30 : i1 to i32
    %c0_i32_23 = arith.constant 0 : i32
    %32 = arith.cmpi ne, %31, %c0_i32_23 : i32
    scf.if %32 {
      %c0_24 = arith.constant 0 : index
      %c0_25 = arith.constant 0 : index
      %33 = vector.load %arg11[%c0_24, %c0_25] : memref<16x128xf32, #tpu.memory_space<vmem>>, vector<16x128xf32>
      %c0_26 = arith.constant 0 : index
      %c0_27 = arith.constant 0 : index
      %34 = vector.load %arg10[%c0_26, %c0_27] : memref<16x128xf32, #tpu.memory_space<vmem>>, vector<16x128xf32>
      tpu.vector_store %arg10[%c0_26, %c0_27], %33 {strides = array<i32>} : memref<16x128xf32, #tpu.memory_space<vmem>>, vector<16x128xf32>,
    } else {
    }
    return
  }
  func.func @transform_0(%arg0: i32, %arg1: i32, %arg2: i32) -> (i32, i32) {
    %c0_i32 = arith.constant 0 : i32
    %c0_i32_0 = arith.constant 0 : i32
    return %arg0, %c0_i32 : i32, i32
  }
  func.func @transform_1(%arg0: i32, %arg1: i32, %arg2: i32) -> (i32, i32, i32) {
    %c0_i32 = arith.constant 0 : i32
    %c0_i32_0 = arith.constant 0 : i32
    %c0_i32_1 = arith.constant 0 : i32
    return %arg1, %c0_i32, %c0_i32_0 : i32, i32, i32
  }
  func.func @transform_2(%arg0: i32, %arg1: i32, %arg2: i32) -> (i32, i32, i32) {
    %c0_i32 = arith.constant 0 : i32
    %c0_i32_0 = arith.constant 0 : i32
    %c0_i32_1 = arith.constant 0 : i32
    return %arg1, %c0_i32, %c0_i32_0 : i32, i32, i32
  }
  func.func @transform_3(%arg0: i32, %arg1: i32, %arg2: i32) -> (i32, i32, i32) {
    %c0_i32 = arith.constant 0 : i32
    %c0_i32_0 = arith.constant 0 : i32
    return %arg1, %c0_i32, %arg2 : i32, i32, i32
  }
  func.func @transform_4(%arg0: i32, %arg1: i32, %arg2: i32) -> (i32, i32, i32) {
    %c0_i32 = arith.constant 0 : i32
    %c0_i32_0 = arith.constant 0 : i32
    return %arg1, %c0_i32, %arg2 : i32, i32, i32
  }
  func.func @transform_5(%arg0: i32, %arg1: i32, %arg2: i32) -> (i32, i32, i32) {
    %c0_i32 = arith.constant 0 : i32
    %c0_i32_0 = arith.constant 0 : i32
    return %arg1, %arg2, %c0_i32 : i32, i32, i32
  }
  func.func @transform_6(%arg0: i32, %arg1: i32, %arg2: i32) -> (i32, i32, i32) {
    %c0_i32 = arith.constant 0 : i32
    %c0_i32_0 = arith.constant 0 : i32
    %c0_i32_1 = arith.constant 0 : i32
    return %arg1, %c0_i32, %c0_i32_0 : i32, i32, i32
  }
  func.func @transform_7(%arg0: i32, %arg1: i32, %arg2: i32) -> (i32, i32) {
    %c0_i32 = arith.constant 0 : i32
    %c0_i32_0 = arith.constant 0 : i32
    return %arg0, %c0_i32 : i32, i32
  }
}

</mosaic_0001>

<llo_original>
// kernel: tpu_custom_call.1
$region0: #{tpu_custom_call.1}
  #allocation0 [shape = 'u32[]', space=smem, size = 0x4, offset = 0x4, fixed_abs, tag = 'smem constant byte address 0x4 - core index']
  #allocation1 [shape = 'u32[144,128]{1,0:T(1,128)}', space=vmem, size = 0x12000, scoped, tag = 'internal scratch']
  #allocation2 [shape = 'f32[16,128]{1,0:T(8,128)}', space=vmem, size = 0x2000, scoped, tag = 'scratch operand']
  #allocation3 [shape = 'bf16[16,128]{1,0:T(8,128)(2,1)}', space=vmem, size = 0x1000, scoped, tag = 'scratch operand']
  #allocation4 [shape = 'f32[16,128]{1,0:T(8,128)}', space=vmem, size = 0x2000, scoped, tag = 'scratch operand']
  %s0 = inlined_call_operand.hbm [shape: f32[16,128], index: 0, kind: input, shape index: {}]
  %s1 = inlined_call_operand.hbm [shape: f32[2,1,128], index: 1, kind: input, shape index: {}]
  %s2 = inlined_call_operand.vmem [shape: f32[2,1,128], index: 2, kind: input, shape index: {}]
  %s3 = inlined_call_operand.hbm [shape: bf16[2,128,256], index: 3, kind: input, shape index: {}]
  %s4 = inlined_call_operand.vmem [shape: f32[2,1,256], index: 4, kind: input, shape index: {}]
  %s5 = inlined_call_operand.hbm [shape: bf16[2,256,128], index: 5, kind: input, shape index: {}]
  %s6 = inlined_call_operand.vmem [shape: f32[2,1,128], index: 6, kind: input, shape index: {}]
  %s7 = inlined_call_operand.hbm [shape: f32[16,128], index: 7, kind: output, shape index: {}]
  %s8 = sld [smem:[#allocation0]]
  $region93: #{tpu_custom_call.1} parent=0
    _
  %s10 = ssub.s32 1, %s8
  %s11 = scalar_select 0, %s10, %s8
  $region1: #{tpu_custom_call.1} parent=0
    #allocation5 [shape = 'u8[8192]{0}', space=vmem, size = 0x2000, scoped, tag = 'input window, operand 0, single buffered']
    #allocation6 [shape = 's32[2]{0}', space=sflag, size = 0x8, scoped, tag = 'scoped memory for tpu_custom_call.1']
    #allocation7 [shape = 's32[2]{0}', space=sflag, size = 0x8, scoped, tag = 'scoped memory for tpu_custom_call.1']
    #allocation8 [shape = 'u8[1024]{0}', space=vmem, size = 0x400, scoped, tag = 'input window, operand 1']
    #allocation9 [shape = 's32[2]{0}', space=sflag, size = 0x8, scoped, tag = 'scoped memory for tpu_custom_call.1']
    #allocation10 [shape = 'u8[131072]{0}', space=vmem, size = 0x20000, scoped, tag = 'input window, operand 3']
    #allocation11 [shape = 'u8[131072]{0}', space=vmem, size = 0x20000, scoped, tag = 'input window, operand 5']
    #allocation12 [shape = 's32[2]{0}', space=sflag, size = 0x8, scoped, tag = 'scoped memory for tpu_custom_call.1']
    #allocation13 [shape = 'u8[8192]{0}', space=vmem, size = 0x2000, scoped, tag = 'output window, operand 0, single buffered']
    %12 = vsyncpa [#allocation6], 0
    %13 = vsyncpa [#allocation9], 0
    %s14 = scalar_lea.sflag [#allocation9], 1
    %15 = vsyncpa %s14, 0
    %16 = vsyncpa [#allocation12], 0
    %s17 = scalar_lea.sflag [#allocation12], 1
    %18 = vsyncpa %s17, 0
    %19 = vsyncpa [#allocation7], 0
    loop: start=0, step=1, limit=4
    $region2: #{tpu_custom_call.1} parent=1 // loop_pre_header
      _
    $region3: #{tpu_custom_call.1} parent=1 // loop_header
      %s21 = sphi 0, %s25
      %p22 = scmp.ge.s32.totalorder %s21, 4
      %s28 = sphi 0, %s47
      %s29 = sphi 0, %s43
      %s30 = sphi 0, %s39
      %s31 = sphi 0, %s28
      %s32 = sphi 0, %s29
      %s33 = sphi 0, %s30
      %s34 = sphi 0, %s31
      %s35 = sphi 0, %s32
      %s36 = sphi 0, %s33
      %s50 = sphi 0, %s52
      %s53 = sphi 0, %s50
      %s54 = sphi 0, %s53
      %s70 = sphi 0, %s54
      %s76 = sphi 0, %s78
      %s79 = sphi 0, %s76
      %s80 = sphi 0, %s79
      %s96 = sphi 0, %s80
      %s102 = sphi 0, %s104
      %s105 = sphi 0, %s102
      %s106 = sphi 0, %s105
      %s122 = sphi 0, %s106
      %s130 = sphi 0, %s132
      %s133 = sphi 0, %s130
      %s134 = sphi 0, %s133
      %s150 = sphi 0, %s134
      %s158 = sphi 0, %s160
      %s161 = sphi 0, %s158
      %s162 = sphi 0, %s161
      %s178 = sphi 0, %s162
      %s186 = sphi 0, %s188
      %s189 = sphi 0, %s186
      %s190 = sphi 0, %s189
      %s206 = sphi 0, %s190
      %s212 = sphi 0, %s214
      %s215 = sphi 0, %s212
      %s216 = sphi 0, %s215
      %s232 = sphi 0, %s216
      %s238 = sphi 0, %s240
      %s241 = sphi 0, %s238
      %s242 = sphi 0, %s241
      %s258 = sphi 0, %s242
    $region4: #{tpu_custom_call.1} parent=1 // loop_header_branch
      %24 = sbr.rel (%p22) target = $region8
    $region5: #{tpu_custom_call.1} parent=1 // loop_body
      %s26 = ssub.s32 %s21, 1
      %s27 = ssub.s32 %s21, 2
      %s37 = sadd.s32 1, %s30
      %p38 = scmp.ge.s32.totalorder %s37, 1
      %s39 = scalar_select %p38, 0, %s37
      %s40 = sadd.s32 1, %s29
      %s41 = scalar_select %p38, %s40, %s29
      %p42 = scmp.ge.s32.totalorder %s41, 2
      %s43 = scalar_select %p42, 0, %s41
      %s44 = sadd.s32 1, %s28
      %s45 = scalar_select %p42, %s44, %s28
      %p46 = scmp.ge.s32.totalorder %s45, 1
      %s47 = scalar_select %p46, 0, %s45
      %s48 = ssub.s32 %s28, %s47
      %p49 = scmp.eq.s32.totalorder %s48, 0
      %s51 = sadd.s32 %s50, 1
      %s52 = scalar_select %p49, %s50, %s51
      %p55 = pneg %p49
      %p56 = scmp.eq.s32.totalorder %s21, 1
      %p57 = por %p55, %p56
      %p58 = scmp.ne.s32.totalorder %s50, %s53
      %p59 = scmp.eq.s32.totalorder %s21, 0
      %p60 = por %p58, %p59
      %p61 = scmp.ne.s32.totalorder %s50, %s53
      %p62 = scmp.eq.s32.totalorder %s26, 1
      %p63 = por %p61, %p62
      %p64 = scmp.ne.s32.totalorder %s53, %s54
      %p65 = scmp.eq.s32.totalorder %s26, 0
      %p66 = por %p64, %p65
      %p67 = scmp.ne.s32.totalorder %s53, %s54
      %p68 = scmp.eq.s32.totalorder %s27, 1
      %p69 = por %p67, %p68
      %p71 = scmp.ne.s32.totalorder %s54, %s70
      %p72 = scmp.eq.s32.totalorder %s27, 0
      %p73 = por %p71, %p72
      %s74 = ssub.s32 %s29, %s43
      %p75 = scmp.eq.s32.totalorder %s74, 0
      %s77 = sadd.s32 %s76, 1
      %s78 = scalar_select %p75, %s76, %s77
      %p81 = pneg %p75
      %p82 = scmp.eq.s32.totalorder %s21, 1
      %p83 = por %p81, %p82
      %p84 = scmp.ne.s32.totalorder %s76, %s79
      %p85 = scmp.eq.s32.totalorder %s21, 0
      %p86 = por %p84, %p85
      %p87 = scmp.ne.s32.totalorder %s76, %s79
      %p88 = scmp.eq.s32.totalorder %s26, 1
      %p89 = por %p87, %p88
      %p90 = scmp.ne.s32.totalorder %s79, %s80
      %p91 = scmp.eq.s32.totalorder %s26, 0
      %p92 = por %p90, %p91
      %p93 = scmp.ne.s32.totalorder %s79, %s80
      %p94 = scmp.eq.s32.totalorder %s27, 1
      %p95 = por %p93, %p94
      %p97 = scmp.ne.s32.totalorder %s80, %s96
      %p98 = scmp.eq.s32.totalorder %s27, 0
      %p99 = por %p97, %p98
      %s100 = ssub.s32 %s29, %s43
      %p101 = scmp.eq.s32.totalorder %s100, 0
      %s103 = sadd.s32 %s102, 1
      %s104 = scalar_select %p101, %s102, %s103
      %p107 = pneg %p101
      %p108 = scmp.eq.s32.totalorder %s21, 1
      %p109 = por %p107, %p108
      %p110 = scmp.ne.s32.totalorder %s102, %s105
      %p111 = scmp.eq.s32.totalorder %s21, 0
      %p112 = por %p110, %p111
      %p113 = scmp.ne.s32.totalorder %s102, %s105
      %p114 = scmp.eq.s32.totalorder %s26, 1
      %p115 = por %p113, %p114
      %p116 = scmp.ne.s32.totalorder %s105, %s106
      %p117 = scmp.eq.s32.totalorder %s26, 0
      %p118 = por %p116, %p117
      %p119 = scmp.ne.s32.totalorder %s105, %s106
      %p120 = scmp.eq.s32.totalorder %s27, 1
      %p121 = por %p119, %p120
      %p123 = scmp.ne.s32.totalorder %s106, %s122
      %p124 = scmp.eq.s32.totalorder %s27, 0
      %p125 = por %p123, %p124
      %s126 = ssub.s32 %s29, %s43
      %s127 = ssub.s32 %s30, %s39
      %s128 = sor.u32 %s126, %s127
      %p129 = scmp.eq.s32.totalorder %s128, 0
      %s131 = sadd.s32 %s130, 1
      %s132 = scalar_select %p129, %s130, %s131
      %p135 = pneg %p129
      %p136 = scmp.eq.s32.totalorder %s21, 1
      %p137 = por %p135, %p136
      %p138 = scmp.ne.s32.totalorder %s130, %s133
      %p139 = scmp.eq.s32.totalorder %s21, 0
      %p140 = por %p138, %p139
      %p141 = scmp.ne.s32.totalorder %s130, %s133
      %p142 = scmp.eq.s32.totalorder %s26, 1
      %p143 = por %p141, %p142
      %p144 = scmp.ne.s32.totalorder %s133, %s134
      %p145 = scmp.eq.s32.totalorder %s26, 0
      %p146 = por %p144, %p145
      %p147 = scmp.ne.s32.totalorder %s133, %s134
      %p148 = scmp.eq.s32.totalorder %s27, 1
      %p149 = por %p147, %p148
      %p151 = scmp.ne.s32.totalorder %s134, %s150
      %p152 = scmp.eq.s32.totalorder %s27, 0
      %p153 = por %p151, %p152
      %s154 = ssub.s32 %s29, %s43
      %s155 = ssub.s32 %s30, %s39
      %s156 = sor.u32 %s154, %s155
      %p157 = scmp.eq.s32.totalorder %s156, 0
      %s159 = sadd.s32 %s158, 1
      %s160 = scalar_select %p157, %s158, %s159
      %p163 = pneg %p157
      %p164 = scmp.eq.s32.totalorder %s21, 1
      %p165 = por %p163, %p164
      %p166 = scmp.ne.s32.totalorder %s158, %s161
      %p167 = scmp.eq.s32.totalorder %s21, 0
      %p168 = por %p166, %p167
      %p169 = scmp.ne.s32.totalorder %s158, %s161
      %p170 = scmp.eq.s32.totalorder %s26, 1
      %p171 = por %p169, %p170
      %p172 = scmp.ne.s32.totalorder %s161, %s162
      %p173 = scmp.eq.s32.totalorder %s26, 0
      %p174 = por %p172, %p173
      %p175 = scmp.ne.s32.totalorder %s161, %s162
      %p176 = scmp.eq.s32.totalorder %s27, 1
      %p177 = por %p175, %p176
      %p179 = scmp.ne.s32.totalorder %s162, %s178
      %p180 = scmp.eq.s32.totalorder %s27, 0
      %p181 = por %p179, %p180
      %s182 = ssub.s32 %s29, %s43
      %s183 = ssub.s32 %s30, %s39
      %s184 = sor.u32 %s182, %s183
      %p185 = scmp.eq.s32.totalorder %s184, 0
      %s187 = sadd.s32 %s186, 1
      %s188 = scalar_select %p185, %s186, %s187
      %p191 = pneg %p185
      %p192 = scmp.eq.s32.totalorder %s21, 1
      %p193 = por %p191, %p192
      %p194 = scmp.ne.s32.totalorder %s186, %s189
      %p195 = scmp.eq.s32.totalorder %s21, 0
      %p196 = por %p194, %p195
      %p197 = scmp.ne.s32.totalorder %s186, %s189
      %p198 = scmp.eq.s32.totalorder %s26, 1
      %p199 = por %p197, %p198
      %p200 = scmp.ne.s32.totalorder %s189, %s190
      %p201 = scmp.eq.s32.totalorder %s26, 0
      %p202 = por %p200, %p201
      %p203 = scmp.ne.s32.totalorder %s189, %s190
      %p204 = scmp.eq.s32.totalorder %s27, 1
      %p205 = por %p203, %p204
      %p207 = scmp.ne.s32.totalorder %s190, %s206
      %p208 = scmp.eq.s32.totalorder %s27, 0
      %p209 = por %p207, %p208
      %s210 = ssub.s32 %s29, %s43
      %p211 = scmp.eq.s32.totalorder %s210, 0
      %s213 = sadd.s32 %s212, 1
      %s214 = scalar_select %p211, %s212, %s213
      %p217 = pneg %p211
      %p218 = scmp.eq.s32.totalorder %s21, 1
      %p219 = por %p217, %p218
      %p220 = scmp.ne.s32.totalorder %s212, %s215
      %p221 = scmp.eq.s32.totalorder %s21, 0
      %p222 = por %p220, %p221
      %p223 = scmp.ne.s32.totalorder %s212, %s215
      %p224 = scmp.eq.s32.totalorder %s26, 1
      %p225 = por %p223, %p224
      %p226 = scmp.ne.s32.totalorder %s215, %s216
      %p227 = scmp.eq.s32.totalorder %s26, 0
      %p228 = por %p226, %p227
      %p229 = scmp.ne.s32.totalorder %s215, %s216
      %p230 = scmp.eq.s32.totalorder %s27, 1
      %p231 = por %p229, %p230
      %p233 = scmp.ne.s32.totalorder %s216, %s232
      %p234 = scmp.eq.s32.totalorder %s27, 0
      %p235 = por %p233, %p234
      %s236 = ssub.s32 %s28, %s47
      %p237 = scmp.eq.s32.totalorder %s236, 0
      %s239 = sadd.s32 %s238, 1
      %s240 = scalar_select %p237, %s238, %s239
      %p243 = pneg %p237
      %p244 = scmp.eq.s32.totalorder %s21, 1
      %p245 = por %p243, %p244
      %p246 = scmp.ne.s32.totalorder %s238, %s241
      %p247 = scmp.eq.s32.totalorder %s21, 0
      %p248 = por %p246, %p247
      %p249 = scmp.ne.s32.totalorder %s238, %s241
      %p250 = scmp.eq.s32.totalorder %s26, 1
      %p251 = por %p249, %p250
      %p252 = scmp.ne.s32.totalorder %s241, %s242
      %p253 = scmp.eq.s32.totalorder %s26, 0
      %p254 = por %p252, %p253
      %p255 = scmp.ne.s32.totalorder %s241, %s242
      %p256 = scmp.eq.s32.totalorder %s27, 1
      %p257 = por %p255, %p256
      %p259 = scmp.ne.s32.totalorder %s242, %s258
      %p260 = scmp.eq.s32.totalorder %s27, 0
      %p261 = por %p259, %p260
      %p262 = scmp.le.s32.totalorder 1, %s21
      %p263 = scmp.lt.s32.totalorder %s21, 3
      %p264 = pnand %p262, %p263
      %p265 = pneg %p264
      // Predicated region
      $region9: #{tpu_custom_call.1} parent=5 // pred_check
        _
      $region10: #{tpu_custom_call.1} parent=5 // pred_check_branch
        %267 = sbr.rel (%p264) target = $region12
      $region11: #{tpu_custom_call.1} parent=5 // pred_region
        %s268 = ssub.s32 %s21, 1
        // Predicated region
        $region13: #{tpu_custom_call.1} parent=11 // pred_check
          %p269 = pneg %p66
        $region14: #{tpu_custom_call.1} parent=11 // pred_check_branch
          %271 = sbr.rel (%p269) target = $region16
        $region15: #{tpu_custom_call.1} parent=11 // pred_region
          %s272 = smul.u32 2, %s31
          %s274 = ssub.s32 256, 256
          %275 = vsyncadd [#allocation6], %s274
          %s276 = smul.addr %s272, 128
          %s277 = scalar_lea.hbm %s0, %s276
          %s278 = sshll.u32 [#allocation5], 4
          %s279 = int_to_ptr.vmem [resolvable:$true] %s278
          %284 = dma.hbm_to_vmem [thread:$0]  %s277, 256, %s279, [#allocation6], 128, 128, 8
        $region16: #{tpu_custom_call.1} parent=11 // pred_fallthru
          _
      $region12: #{tpu_custom_call.1} parent=5 // pred_fallthru
        _
      %p285 = scmp.lt.s32.totalorder %s21, 2
      // Predicated region
      $region17: #{tpu_custom_call.1} parent=5 // pred_check
        %p286 = pneg %p285
      $region18: #{tpu_custom_call.1} parent=5 // pred_check_branch
        %288 = sbr.rel (%p286) target = $region20
      $region19: #{tpu_custom_call.1} parent=5 // pred_region
        // Predicated region
        $region21: #{tpu_custom_call.1} parent=19 // pred_check
          %p289 = pneg %p86
        $region22: #{tpu_custom_call.1} parent=19 // pred_check_branch
          %291 = sbr.rel (%p289) target = $region24
        $region23: #{tpu_custom_call.1} parent=19 // pred_region
          %s292 = sand.u32 %s21, 1
          %s293 = scalar_lea.sflag [#allocation9], %s292
          %s294 = sand.u32 %s76, 1
          %s295 = scalar_lea.vmem [#allocation8], %s294
          %s297 = ssub.s32 16, 16
          %298 = vsyncadd %s293, %s297
          %s299 = smul.addr %s29, 16
          %s300 = scalar_lea.hbm %s1, %s299
          %s302 = sshll.u32 %s295, 4
          %s303 = int_to_ptr.vmem [resolvable:$true] %s302
          %305 = dma.hbm_to_vmem [thread:$0]  %s300, 16, %s303, %s293
        $region24: #{tpu_custom_call.1} parent=19 // pred_fallthru
          _
        // Predicated region
        $region25: #{tpu_custom_call.1} parent=19 // pred_check
          %p306 = pneg %p112
        $region26: #{tpu_custom_call.1} parent=19 // pred_check_branch
          %308 = sbr.rel (%p306) target = $region28
        $region27: #{tpu_custom_call.1} parent=19 // pred_region
          %p309 = scmp.lt.s32.totalorder %s29, 1
          %s310 = scalar_select %p309, %s29, 1
          %s311 = scalar_lea.vmem %s2, %s310
        $region28: #{tpu_custom_call.1} parent=19 // pred_fallthru
          _
        // Predicated region
        $region29: #{tpu_custom_call.1} parent=19 // pred_check
          %p312 = pneg %p140
        $region30: #{tpu_custom_call.1} parent=19 // pred_check_branch
          %314 = sbr.rel (%p312) target = $region32
        $region31: #{tpu_custom_call.1} parent=19 // pred_region
          %s315 = sand.u32 %s21, 1
          %s316 = scalar_lea.sflag [#allocation9], %s315
          %s317 = sand.u32 %s130, 1
          %s318 = smul.addr %s317, 128
          %s319 = scalar_lea.vmem [#allocation10], %s318
          %s320 = smul.u32 2, %s30
          %s322 = ssub.s32 2048, 2048
          %323 = vsyncadd %s316, %s322
          %s324 = smul.addr %s29, 32
          %s325 = sadd.s32 %s320, %s324
          %s326 = smul.addr %s325, 64
          %s327 = scalar_lea.hbm %s3, %s326
          %s328 = sshll.u32 %s319, 4
          %s329 = int_to_ptr.vmem [resolvable:$true] %s328
          %334 = dma.hbm_to_vmem [thread:$0]  %s327, 2048, %s329, %s316, 128, 128, 8
        $region32: #{tpu_custom_call.1} parent=19 // pred_fallthru
          _
        // Predicated region
        $region33: #{tpu_custom_call.1} parent=19 // pred_check
          %p335 = pneg %p168
        $region34: #{tpu_custom_call.1} parent=19 // pred_check_branch
          %337 = sbr.rel (%p335) target = $region36
        $region35: #{tpu_custom_call.1} parent=19 // pred_region
          %s338 = smul.u32 2, %s30
          %p339 = scmp.lt.s32.totalorder %s29, 1
          %s340 = scalar_select %p339, %s29, 1
          %p341 = scmp.lt.s32.totalorder %s338, 1
          %s342 = scalar_select %p341, %s338, 1
          %s343 = smul.addr %s340, 2
          %s344 = sadd.s32 %s342, %s343
          %s345 = scalar_lea.vmem %s4, %s344
          %s346 = smul.u32 2, %s30
        $region36: #{tpu_custom_call.1} parent=19 // pred_fallthru
          _
        // Predicated region
        $region37: #{tpu_custom_call.1} parent=19 // pred_check
          %p347 = pneg %p196
        $region38: #{tpu_custom_call.1} parent=19 // pred_check_branch
          %349 = sbr.rel (%p347) target = $region40
        $region39: #{tpu_custom_call.1} parent=19 // pred_region
          %s350 = sand.u32 %s186, 1
          %s351 = scalar_lea.sflag [#allocation12], %s350
          %s352 = sand.u32 %s186, 1
          %s353 = smul.addr %s352, 128
          %s354 = scalar_lea.vmem [#allocation11], %s353
          %s355 = smul.u32 32, %s30
          %s357 = ssub.s32 2048, 2048
          %358 = vsyncadd %s351, %s357
          %s359 = smul.addr %s29, 32
          %s360 = sadd.s32 %s355, %s359
          %s361 = smul.addr %s360, 64
          %s362 = scalar_lea.hbm %s5, %s361
          %s363 = sshll.u32 %s354, 4
          %s364 = int_to_ptr.vmem [resolvable:$true] %s363
          %369 = dma.hbm_to_vmem [thread:$0]  %s362, 2048, %s364, %s351, 64, 64, 4
        $region40: #{tpu_custom_call.1} parent=19 // pred_fallthru
          _
        // Predicated region
        $region41: #{tpu_custom_call.1} parent=19 // pred_check
          %p370 = pneg %p222
        $region42: #{tpu_custom_call.1} parent=19 // pred_check_branch
          %372 = sbr.rel (%p370) target = $region44
        $region43: #{tpu_custom_call.1} parent=19 // pred_region
          %p373 = scmp.lt.s32.totalorder %s29, 1
          %s374 = scalar_select %p373, %s29, 1
          %s375 = scalar_lea.vmem %s6, %s374
        $region44: #{tpu_custom_call.1} parent=19 // pred_fallthru
          _
      $region20: #{tpu_custom_call.1} parent=5 // pred_fallthru
        _
      %p376 = scmp.le.s32.totalorder 1, %s21
      %p377 = scmp.lt.s32.totalorder %s21, 3
      %p378 = pnand %p376, %p377
      %p379 = pneg %p378
      // Predicated region
      $region45: #{tpu_custom_call.1} parent=5 // pred_check
        _
      $region46: #{tpu_custom_call.1} parent=5 // pred_check_branch
        %381 = sbr.rel (%p378) target = $region48
      $region47: #{tpu_custom_call.1} parent=5 // pred_region
        %s382 = ssub.s32 %s21, 1
        // Predicated region
        $region49: #{tpu_custom_call.1} parent=47 // pred_check
          %p383 = pneg %p66
        $region50: #{tpu_custom_call.1} parent=47 // pred_check_branch
          %385 = sbr.rel (%p383) target = $region52
        $region51: #{tpu_custom_call.1} parent=47 // pred_region
          %386 = dma.done [#allocation6], 256
        $region52: #{tpu_custom_call.1} parent=47 // pred_fallthru
          _
        %s387 = sand.u32 %s26, 1
        %s388 = scalar_lea.sflag [#allocation9], %s387
        %s389 = sand.u32 %s79, 1
        %s390 = scalar_lea.vmem [#allocation8], %s389
        // Predicated region
        $region53: #{tpu_custom_call.1} parent=47 // pred_check
          %p391 = pneg %p92
        $region54: #{tpu_custom_call.1} parent=47 // pred_check_branch
          %393 = sbr.rel (%p391) target = $region56
        $region55: #{tpu_custom_call.1} parent=47 // pred_region
          %394 = dma.done %s388, 16
        $region56: #{tpu_custom_call.1} parent=47 // pred_fallthru
          _
        %s395 = sand.u32 %s26, 1
        %s396 = scalar_lea.sflag [#allocation9], %s395
        %s397 = sand.u32 %s133, 1
        %s398 = smul.addr %s397, 128
        %s399 = scalar_lea.vmem [#allocation10], %s398
        // Predicated region
        $region57: #{tpu_custom_call.1} parent=47 // pred_check
          %p400 = pneg %p146
        $region58: #{tpu_custom_call.1} parent=47 // pred_check_branch
          %402 = sbr.rel (%p400) target = $region60
        $region59: #{tpu_custom_call.1} parent=47 // pred_region
          %403 = dma.done %s396, 2048
        $region60: #{tpu_custom_call.1} parent=47 // pred_fallthru
          _
        %s404 = sand.u32 %s189, 1
        %s405 = scalar_lea.sflag [#allocation12], %s404
        %s406 = sand.u32 %s189, 1
        %s407 = smul.addr %s406, 128
        %s408 = scalar_lea.vmem [#allocation11], %s407
        // Predicated region
        $region61: #{tpu_custom_call.1} parent=47 // pred_check
          %p409 = pneg %p202
        $region62: #{tpu_custom_call.1} parent=47 // pred_check_branch
          %411 = sbr.rel (%p409) target = $region64
        $region63: #{tpu_custom_call.1} parent=47 // pred_region
          %412 = dma.done %s405, 2048
        $region64: #{tpu_custom_call.1} parent=47 // pred_fallthru
          _
        %p413 = pneg %p66
        %p414 = pneg %p63
        %s415 = sand.u32 %s26, 1
        %s416 = scalar_lea.sflag [#allocation9], %s415
        %s417 = sand.u32 %s79, 1
        %s418 = scalar_lea.vmem [#allocation8], %s417
        %p419 = pneg %p92
        %p420 = pneg %p89
        %p421 = scmp.lt.s32.totalorder %s32, 1
        %s422 = scalar_select %p421, %s32, 1
        %s423 = scalar_lea.vmem %s2, %s422
        %p424 = pneg %p118
        %p425 = pneg %p115
        %s426 = sand.u32 %s26, 1
        %s427 = scalar_lea.sflag [#allocation9], %s426
        %s428 = sand.u32 %s133, 1
        %s429 = smul.addr %s428, 128
        %s430 = scalar_lea.vmem [#allocation10], %s429
        %p431 = pneg %p146
        %p432 = pneg %p143
        %s433 = smul.u32 2, %s33
        %p434 = scmp.lt.s32.totalorder %s32, 1
        %s435 = scalar_select %p434, %s32, 1
        %p436 = scmp.lt.s32.totalorder %s433, 1
        %s437 = scalar_select %p436, %s433, 1
        %s438 = smul.addr %s435, 2
        %s439 = sadd.s32 %s437, %s438
        %s440 = scalar_lea.vmem %s4, %s439
        %p441 = pneg %p174
        %p442 = pneg %p171
        %s443 = sand.u32 %s189, 1
        %s444 = scalar_lea.sflag [#allocation12], %s443
        %s445 = sand.u32 %s189, 1
        %s446 = smul.addr %s445, 128
        %s447 = scalar_lea.vmem [#allocation11], %s446
        %p448 = pneg %p202
        %p449 = pneg %p199
        %p450 = scmp.lt.s32.totalorder %s32, 1
        %s451 = scalar_select %p450, %s32, 1
        %s452 = scalar_lea.vmem %s6, %s451
        %p453 = pneg %p228
        %p454 = pneg %p225
        %p455 = pneg %p254
        %p456 = pneg %p251
        %s457 = smul.u32 2, %s31
        %p458 = scmp.lt.s32.totalorder %s32, 1
        %s459 = scalar_select %p458, %s32, 1
        %s460 = scalar_lea.vmem %s2, %s459
        %s461 = smul.u32 2, %s33
        %s462 = smul.u32 2, %s33
        %p463 = scmp.lt.s32.totalorder %s32, 1
        %s464 = scalar_select %p463, %s32, 1
        %p465 = scmp.lt.s32.totalorder %s462, 1
        %s466 = scalar_select %p465, %s462, 1
        %s467 = smul.addr %s464, 2
        %s468 = sadd.s32 %s466, %s467
        %s469 = scalar_lea.vmem %s4, %s468
        %s470 = smul.u32 2, %s33
        %s471 = smul.u32 32, %s33
        %p472 = scmp.lt.s32.totalorder %s32, 1
        %s473 = scalar_select %p472, %s32, 1
        %s474 = scalar_lea.vmem %s6, %s473
        %s475 = smul.u32 2, %s31
        %p477 = scmp.eq.s32.totalorder %s32, 0
        %p478 = scmp.eq.s32.totalorder %s33, 0
        %p479 = pnand %p477, %p478
        %p480 = pneg %p479
        // Predicated region
        $region65: #{tpu_custom_call.1} parent=47 // pred_check
          _
        $region66: #{tpu_custom_call.1} parent=47 // pred_check_branch
          %482 = sbr.rel (%p479) target = $region68
        $region67: #{tpu_custom_call.1} parent=47 // pred_region
          %v483 = vld [vmem:[#allocation5] sm:$0xff]
          %v484 = vld [vmem:[#allocation5 + $0x8] sm:$0xff]
          %485 = vst [vmem:[#allocation2] sm:$0xff] %v483
          %486 = vst [vmem:[#allocation2 + $0x8] sm:$0xff] %v484
        $region68: #{tpu_custom_call.1} parent=47 // pred_fallthru
          _
        // Predicated region
        $region69: #{tpu_custom_call.1} parent=47 // pred_check
          %p487 = pneg %p478
        $region70: #{tpu_custom_call.1} parent=47 // pred_check_branch
          %489 = sbr.rel (%p487) target = $region72
        $region71: #{tpu_custom_call.1} parent=47 // pred_region
          %v490 = vld [vmem:[#allocation2] sm:$0xff]
          %v491 = vld [vmem:[#allocation2 + $0x8] sm:$0xff]
          %492 = vadd.xlane.f32.xlu0 %v490
          %v493 = vpop.xlane.xlu0 %492
          %494 = vadd.xlane.f32.xlu0 %v491
          %v495 = vpop.xlane.xlu0 %494
          %v496 = vrcp.pop 128.0
          %v497 = vmul.f32 %v493, %v496
          %v498 = vmul.f32 %v495, %v496
          %v499 = vsub.f32 %v490, %v497
          %v500 = vsub.f32 %v491, %v498
          %v501 = vmul.f32 %v499, %v499
          %v502 = vmul.f32 %v500, %v500
          %503 = vadd.xlane.f32.xlu0 %v501
          %v504 = vpop.xlane.xlu0 %503
          %505 = vadd.xlane.f32.xlu0 %v502
          %v506 = vpop.xlane.xlu0 %505
          %v507 = vmul.f32 %v504, %v496
          %v508 = vmul.f32 %v506, %v496
          %v509 = vadd.f32 %v507, 1e-05
          %v510 = vadd.f32 %v508, 1e-05
          %v511 = vrsqrt.pop %v509
          %v512 = vrsqrt.pop %v510
          %v513 = vmul.f32 %v499, %v511
          %v514 = vmul.f32 %v500, %v512
          %v515 = vld [vmem:[%s390] sm:$0x1]
          %v517 = vlaneseq
          %v518 = vshrl.u32 %v517, 7
          %v519 = vsub.s32 0, %v518
          %v520 = vrot.slane %v515, %v519
          %v522 = vmul.f32 %v513, %v520
          %v523 = vmul.f32 %v514, %v520
          %v524 = vld [vmem:[%s460] sm:$0x1]
          %v526 = vlaneseq
          %v527 = vshrl.u32 %v526, 7
          %v528 = vsub.s32 0, %v527
          %v529 = vrot.slane %v524, %v528
          %v531 = vadd.f32 %v522, %v529
          %v532 = vadd.f32 %v523, %v529
          %v533 = vpack.c.bf16 %v532, %v531
          %v535 = vunpack.c.l.b16 %v533
          %v536 = vunpack.c.h.b16 %v533
          %v537 = vpack.c.b16 %v535, %v535
          %v538 = vpack.c.b16 %v536, %v536
          %541 = vst [vmem:[#allocation3] sm:$0xf] %v537
          %542 = vst [vmem:[#allocation3 + $0x4] sm:$0xf] %v538
          %543 = vst [vmem:[#allocation4] sm:$0xff] 0.0
          %544 = vst [vmem:[#allocation4 + $0x8] sm:$0xff] 0.0
        $region72: #{tpu_custom_call.1} parent=47 // pred_fallthru
          _
        %v545 = vld [vmem:[#allocation3] sm:$0xf]
        %v546 = vld [vmem:[#allocation3 + $0x4] sm:$0xf]
        %v547 = vld [vmem:[%s399] sm:$0xff]
        %v548 = vld [vmem:[%s399 + $0x8] sm:$0xff]
        %v549 = vld [vmem:[%s399 + $0x10] sm:$0xff]
        %v550 = vld [vmem:[%s399 + $0x18] sm:$0xff]
        %v551 = vld [vmem:[%s399 + $0x20] sm:$0xff]
        %v552 = vld [vmem:[%s399 + $0x28] sm:$0xff]
        %v553 = vld [vmem:[%s399 + $0x30] sm:$0xff]
        %v554 = vld [vmem:[%s399 + $0x38] sm:$0xff]
        %v555 = vld [vmem:[%s399 + $0x40] sm:$0xff]
        %v556 = vld [vmem:[%s399 + $0x48] sm:$0xff]
        %v557 = vld [vmem:[%s399 + $0x50] sm:$0xff]
        %v558 = vld [vmem:[%s399 + $0x58] sm:$0xff]
        %v559 = vld [vmem:[%s399 + $0x60] sm:$0xff]
        %v560 = vld [vmem:[%s399 + $0x68] sm:$0xff]
        %v561 = vld [vmem:[%s399 + $0x70] sm:$0xff]
        %v562 = vld [vmem:[%s399 + $0x78] sm:$0xff]
        %v563 = vld [vmem:[%s469] sm:$0x3]
        %v565 = vlaneseq
        %v566 = vshrl.u32 %v565, 7
        %v567 = vsub.s32 0, %v566
        %v568 = vrot.slane %v563, %v567
        %v569 = vlaneseq
        %v570 = vshrl.u32 %v569, 7
        %v571 = vsub.s32 1, %v570
        %v572 = vrot.slane %v563, %v571
        %v577 = vunpack.c.l.b16 %v545
        %v578 = vunpack.c.l.b16 %v546
        %v579 = vpack.c.b16 %v578, %v577
        %v597 = vunpack.c.l.b16 %v547
        %v598 = vunpack.c.h.b16 %v547
        %v599 = vunpack.c.l.b16 %v548
        %v600 = vunpack.c.h.b16 %v548
        %v601 = vunpack.c.l.b16 %v549
        %v602 = vunpack.c.h.b16 %v549
        %v603 = vunpack.c.l.b16 %v550
        %v604 = vunpack.c.h.b16 %v550
        %v605 = vunpack.c.l.b16 %v551
        %v606 = vunpack.c.h.b16 %v551
        %v607 = vunpack.c.l.b16 %v552
        %v608 = vunpack.c.h.b16 %v552
        %v609 = vunpack.c.l.b16 %v553
        %v610 = vunpack.c.h.b16 %v553
        %v611 = vunpack.c.l.b16 %v554
        %v612 = vunpack.c.h.b16 %v554
        %v613 = vunpack.c.l.b16 %v555
        %v614 = vunpack.c.h.b16 %v555
        %v615 = vunpack.c.l.b16 %v556
        %v616 = vunpack.c.h.b16 %v556
        %v617 = vunpack.c.l.b16 %v557
        %v618 = vunpack.c.h.b16 %v557
        %v619 = vunpack.c.l.b16 %v558
        %v620 = vunpack.c.h.b16 %v558
        %v621 = vunpack.c.l.b16 %v559
        %v622 = vunpack.c.h.b16 %v559
        %v623 = vunpack.c.l.b16 %v560
        %v624 = vunpack.c.h.b16 %v560
        %v625 = vunpack.c.l.b16 %v561
        %v626 = vunpack.c.h.b16 %v561
        %v627 = vunpack.c.l.b16 %v562
        %v628 = vunpack.c.h.b16 %v562
        %v629 = vpack.c.b16 %v599, %v597
        %v630 = vpack.c.b16 %v600, %v598
        %v631 = vpack.c.b16 %v603, %v601
        %v632 = vpack.c.b16 %v604, %v602
        %v633 = vpack.c.b16 %v607, %v605
        %v634 = vpack.c.b16 %v608, %v606
        %v635 = vpack.c.b16 %v611, %v609
        %v636 = vpack.c.b16 %v612, %v610
        %v637 = vpack.c.b16 %v615, %v613
        %v638 = vpack.c.b16 %v616, %v614
        %v639 = vpack.c.b16 %v619, %v617
        %v640 = vpack.c.b16 %v620, %v618
        %v641 = vpack.c.b16 %v623, %v621
        %v642 = vpack.c.b16 %v624, %v622
        %v643 = vpack.c.b16 %v627, %v625
        %v644 = vpack.c.b16 %v628, %v626
        %661 = vmatprep.subr.bf16.mxu0 %v644
        %662 = vmatpush1.bf16.msra.mxu0 %v643
        %663 = vmatprep.subr.bf16.mxu0 %v642
        %664 = vmatpush1.bf16.msra.mxu0 %v641
        %665 = vmatprep.subr.bf16.mxu0 %v640
        %666 = vmatpush1.bf16.msra.mxu0 %v639
        %667 = vmatprep.subr.bf16.mxu0 %v638
        %668 = vmatpush1.bf16.msra.mxu0 %v637
        %669 = vmatprep.subr.bf16.mxu0 %v636
        %670 = vmatpush1.bf16.msra.mxu0 %v635
        %671 = vmatprep.subr.bf16.mxu0 %v634
        %672 = vmatpush1.bf16.msra.mxu0 %v633
        %673 = vmatprep.subr.bf16.mxu0 %v632
        %674 = vmatpush1.bf16.msra.mxu0 %v631
        %675 = vmatprep.subr.bf16.mxu0 %v630
        %676 = vmatpush1.bf16.msra.mxu0 %v629
        %677 = vmatprep.subr.bf16.mxu0 0
        %678 = vmatpush2.bf16.msra.mxu0 0
        %679 = vmatprep.subr.bf16.mxu0 0
        %680 = vmatpush2.bf16.msra.mxu0 0
        %681 = vmatprep.subr.bf16.mxu0 0
        %682 = vmatpush2.bf16.msra.mxu0 0
        %683 = vmatprep.subr.bf16.mxu0 0
        %684 = vmatpush2.bf16.msra.mxu0 0
        %685 = vmatprep.subr.bf16.mxu0 0
        %686 = vmatpush2.bf16.msra.mxu0 0
        %687 = vmatprep.subr.bf16.mxu0 0
        %688 = vmatpush2.bf16.msra.mxu0 0
        %689 = vmatprep.subr.bf16.mxu0 0
        %690 = vmatpush2.bf16.msra.mxu0 0
        %691 = vmatprep.subr.bf16.mxu0 0
        %692 = vmatpush2.bf16.msra.mxu0 0
        %693 = vmatprep.mubr.bf16.mxu0 0
        %694 = vmatmul.mubr.bf16.gmra.mxu0 %v579
        %v695 = vpop.f32.mrf.mxu0
        %v696 = vadd.f32 %v568, %v695
        %v697 = vpop.f32.mrf.mxu0
        %v698 = vadd.f32 %v572, %v697
        %v699 = vpop.f32.mrf.mxu0
        %v700 = vadd.f32 %v568, %v699
        %v701 = vpop.f32.mrf.mxu0
        %v702 = vadd.f32 %v572, %v701
        %703 = vdwg.mxu0
        %v704 = vmax.f32 %v696, 0.0
        %v705 = vmax.f32 %v698, 0.0
        %v706 = vmax.f32 %v700, 0.0
        %v707 = vmax.f32 %v702, 0.0
        %v708 = vld [vmem:[#allocation4] sm:$0xff]
        %v709 = vld [vmem:[#allocation4 + $0x8] sm:$0xff]
        %v710 = vpack.c.bf16 %v706, %v704
        %v711 = vpack.c.bf16 %v707, %v705
        %v712 = vld [vmem:[%s408] sm:$0xf]
        %v713 = vld [vmem:[%s408 + $0x4] sm:$0xf]
        %v714 = vld [vmem:[%s408 + $0x8] sm:$0xf]
        %v715 = vld [vmem:[%s408 + $0xc] sm:$0xf]
        %v716 = vld [vmem:[%s408 + $0x10] sm:$0xf]
        %v717 = vld [vmem:[%s408 + $0x14] sm:$0xf]
        %v718 = vld [vmem:[%s408 + $0x18] sm:$0xf]
        %v719 = vld [vmem:[%s408 + $0x1c] sm:$0xf]
        %v720 = vld [vmem:[%s408 + $0x20] sm:$0xf]
        %v721 = vld [vmem:[%s408 + $0x24] sm:$0xf]
        %v722 = vld [vmem:[%s408 + $0x28] sm:$0xf]
        %v723 = vld [vmem:[%s408 + $0x2c] sm:$0xf]
        %v724 = vld [vmem:[%s408 + $0x30] sm:$0xf]
        %v725 = vld [vmem:[%s408 + $0x34] sm:$0xf]
        %v726 = vld [vmem:[%s408 + $0x38] sm:$0xf]
        %v727 = vld [vmem:[%s408 + $0x3c] sm:$0xf]
        %v728 = vld [vmem:[%s408 + $0x40] sm:$0xf]
        %v729 = vld [vmem:[%s408 + $0x44] sm:$0xf]
        %v730 = vld [vmem:[%s408 + $0x48] sm:$0xf]
        %v731 = vld [vmem:[%s408 + $0x4c] sm:$0xf]
        %v732 = vld [vmem:[%s408 + $0x50] sm:$0xf]
        %v733 = vld [vmem:[%s408 + $0x54] sm:$0xf]
        %v734 = vld [vmem:[%s408 + $0x58] sm:$0xf]
        %v735 = vld [vmem:[%s408 + $0x5c] sm:$0xf]
        %v736 = vld [vmem:[%s408 + $0x60] sm:$0xf]
        %v737 = vld [vmem:[%s408 + $0x64] sm:$0xf]
        %v738 = vld [vmem:[%s408 + $0x68] sm:$0xf]
        %v739 = vld [vmem:[%s408 + $0x6c] sm:$0xf]
        %v740 = vld [vmem:[%s408 + $0x70] sm:$0xf]
        %v741 = vld [vmem:[%s408 + $0x74] sm:$0xf]
        %v742 = vld [vmem:[%s408 + $0x78] sm:$0xf]
        %v743 = vld [vmem:[%s408 + $0x7c] sm:$0xf]
        %v776 = vunpack.c.l.b16 %v712
        %v777 = vunpack.c.l.b16 %v713
        %v778 = vunpack.c.l.b16 %v714
        %v779 = vunpack.c.l.b16 %v715
        %v780 = vunpack.c.l.b16 %v716
        %v781 = vunpack.c.l.b16 %v717
        %v782 = vunpack.c.l.b16 %v718
        %v783 = vunpack.c.l.b16 %v719
        %v784 = vunpack.c.l.b16 %v720
        %v785 = vunpack.c.l.b16 %v721
        %v786 = vunpack.c.l.b16 %v722
        %v787 = vunpack.c.l.b16 %v723
        %v788 = vunpack.c.l.b16 %v724
        %v789 = vunpack.c.l.b16 %v725
        %v790 = vunpack.c.l.b16 %v726
        %v791 = vunpack.c.l.b16 %v727
        %v792 = vunpack.c.l.b16 %v728
        %v793 = vunpack.c.l.b16 %v729
        %v794 = vunpack.c.l.b16 %v730
        %v795 = vunpack.c.l.b16 %v731
        %v796 = vunpack.c.l.b16 %v732
        %v797 = vunpack.c.l.b16 %v733
        %v798 = vunpack.c.l.b16 %v734
        %v799 = vunpack.c.l.b16 %v735
        %v800 = vunpack.c.l.b16 %v736
        %v801 = vunpack.c.l.b16 %v737
        %v802 = vunpack.c.l.b16 %v738
        %v803 = vunpack.c.l.b16 %v739
        %v804 = vunpack.c.l.b16 %v740
        %v805 = vunpack.c.l.b16 %v741
        %v806 = vunpack.c.l.b16 %v742
        %v807 = vunpack.c.l.b16 %v743
        %v808 = vpack.c.b16 %v777, %v776
        %v809 = vpack.c.b16 %v779, %v778
        %v810 = vpack.c.b16 %v781, %v780
        %v811 = vpack.c.b16 %v783, %v782
        %v812 = vpack.c.b16 %v785, %v784
        %v813 = vpack.c.b16 %v787, %v786
        %v814 = vpack.c.b16 %v789, %v788
        %v815 = vpack.c.b16 %v791, %v790
        %v816 = vpack.c.b16 %v793, %v792
        %v817 = vpack.c.b16 %v795, %v794
        %v818 = vpack.c.b16 %v797, %v796
        %v819 = vpack.c.b16 %v799, %v798
        %v820 = vpack.c.b16 %v801, %v800
        %v821 = vpack.c.b16 %v803, %v802
        %v822 = vpack.c.b16 %v805, %v804
        %v823 = vpack.c.b16 %v807, %v806
        %840 = vmatprep.subr.bf16.mxu0 0
        %841 = vmatpush1.bf16.msra.mxu0 %v815
        %842 = vmatprep.subr.bf16.mxu0 0
        %843 = vmatpush1.bf16.msra.mxu0 %v814
        %844 = vmatprep.subr.bf16.mxu0 0
        %845 = vmatpush1.bf16.msra.mxu0 %v813
        %846 = vmatprep.subr.bf16.mxu0 0
        %847 = vmatpush1.bf16.msra.mxu0 %v812
        %848 = vmatprep.subr.bf16.mxu0 0
        %849 = vmatpush1.bf16.msra.mxu0 %v811
        %850 = vmatprep.subr.bf16.mxu0 0
        %851 = vmatpush1.bf16.msra.mxu0 %v810
        %852 = vmatprep.subr.bf16.mxu0 0
        %853 = vmatpush1.bf16.msra.mxu0 %v809
        %854 = vmatprep.subr.bf16.mxu0 0
        %855 = vmatpush1.bf16.msra.mxu0 %v808
        %856 = vmatprep.subr.bf16.mxu0 0
        %857 = vmatpush2.bf16.msra.mxu0 %v823
        %858 = vmatprep.subr.bf16.mxu0 0
        %859 = vmatpush2.bf16.msra.mxu0 %v822
        %860 = vmatprep.subr.bf16.mxu0 0
        %861 = vmatpush2.bf16.msra.mxu0 %v821
        %862 = vmatprep.subr.bf16.mxu0 0
        %863 = vmatpush2.bf16.msra.mxu0 %v820
        %864 = vmatprep.subr.bf16.mxu0 0
        %865 = vmatpush2.bf16.msra.mxu0 %v819
        %866 = vmatprep.subr.bf16.mxu0 0
        %867 = vmatpush2.bf16.msra.mxu0 %v818
        %868 = vmatprep.subr.bf16.mxu0 0
        %869 = vmatpush2.bf16.msra.mxu0 %v817
        %870 = vmatprep.subr.bf16.mxu0 0
        %871 = vmatpush2.bf16.msra.mxu0 %v816
        %872 = vmatprep.mubr.bf16.mxu0 %v711
        %873 = vmatmul.mubr.bf16.gmra.mxu0 %v710
        %v874 = vpop.f32.mrf.mxu0
        %v875 = vadd.f32 0.0, %v874
        %v876 = vpop.f32.mrf.mxu0
        %v877 = vpop.f32.mrf.mxu0
        %v878 = vadd.f32 0.0, %v877
        %v879 = vpop.f32.mrf.mxu0
        %880 = vdwg.mxu0
        %v881 = vadd.f32 %v708, %v875
        %v882 = vadd.f32 %v709, %v878
        %883 = vst [vmem:[#allocation4] sm:$0xff] %v881
        %884 = vst [vmem:[#allocation4 + $0x8] sm:$0xff] %v882
        // Predicated region
        $region73: #{tpu_custom_call.1} parent=47 // pred_check
          %p885 = pneg %p478
        $region74: #{tpu_custom_call.1} parent=47 // pred_check_branch
          %887 = sbr.rel (%p885) target = $region76
        $region75: #{tpu_custom_call.1} parent=47 // pred_region
          %v888 = vld [vmem:[#allocation2] sm:$0xff]
          %v889 = vld [vmem:[#allocation2 + $0x8] sm:$0xff]
          %v890 = vld [vmem:[#allocation4] sm:$0xff]
          %v891 = vld [vmem:[#allocation4 + $0x8] sm:$0xff]
          %v892 = vadd.f32 %v888, %v890
          %v893 = vadd.f32 %v889, %v891
          %v894 = vld [vmem:[%s474] sm:$0x1]
          %v896 = vlaneseq
          %v897 = vshrl.u32 %v896, 7
          %v898 = vsub.s32 0, %v897
          %v899 = vrot.slane %v894, %v898
          %v901 = vadd.f32 %v892, %v899
          %v902 = vadd.f32 %v893, %v899
          %903 = vst [vmem:[#allocation2] sm:$0xff] %v901
          %904 = vst [vmem:[#allocation2 + $0x8] sm:$0xff] %v902
        $region76: #{tpu_custom_call.1} parent=47 // pred_fallthru
          _
        %p905 = scmp.eq.s32.totalorder %s32, 1
        %p906 = pnand %p905, %p478
        %p907 = pneg %p906
        // Predicated region
        $region77: #{tpu_custom_call.1} parent=47 // pred_check
          _
        $region78: #{tpu_custom_call.1} parent=47 // pred_check_branch
          %909 = sbr.rel (%p906) target = $region80
        $region79: #{tpu_custom_call.1} parent=47 // pred_region
          %v910 = vld [vmem:[#allocation2] sm:$0xff]
          %v911 = vld [vmem:[#allocation2 + $0x8] sm:$0xff]
          %912 = vst [vmem:[#allocation13] sm:$0xff] %v910
          %913 = vst [vmem:[#allocation13 + $0x8] sm:$0xff] %v911
        $region80: #{tpu_custom_call.1} parent=47 // pred_fallthru
          _
        // Predicated region
        $region81: #{tpu_custom_call.1} parent=47 // pred_check
          %p914 = pneg %p251
        $region82: #{tpu_custom_call.1} parent=47 // pred_check_branch
          %916 = sbr.rel (%p914) target = $region84
        $region83: #{tpu_custom_call.1} parent=47 // pred_region
          %s917 = smul.u32 2, %s31
          %s919 = ssub.s32 256, 256
          %920 = vsyncadd [#allocation7], %s919
          %s921 = smul.addr %s917, 128
          %s922 = scalar_lea.hbm %s7, %s921
          %s923 = sshll.u32 [#allocation13], 4
          %s924 = int_to_ptr.vmem [resolvable:$true] %s923
          %929 = dma.vmem_to_hbm [thread:$0]  %s924, 256, %s922, [#allocation7], 128, 128, 8
        $region84: #{tpu_custom_call.1} parent=47 // pred_fallthru
          _
        // Predicated region
        $region85: #{tpu_custom_call.1} parent=47 // pred_check
          %p930 = pneg %p251
        $region86: #{tpu_custom_call.1} parent=47 // pred_check_branch
          %932 = sbr.rel (%p930) target = $region88
        $region87: #{tpu_custom_call.1} parent=47 // pred_region
          %933 = dma.done [#allocation7], 256
        $region88: #{tpu_custom_call.1} parent=47 // pred_fallthru
          _
      $region48: #{tpu_custom_call.1} parent=5 // pred_fallthru
        _
      %p934 = scmp.le.s32.totalorder 2, %s21
      // Predicated region
      $region89: #{tpu_custom_call.1} parent=5 // pred_check
        %p935 = pneg %p934
      $region90: #{tpu_custom_call.1} parent=5 // pred_check_branch
        %937 = sbr.rel (%p935) target = $region92
      $region91: #{tpu_custom_call.1} parent=5 // pred_region
        %s938 = ssub.s32 %s21, 2
      $region92: #{tpu_custom_call.1} parent=5 // pred_fallthru
        _
    $region6: #{tpu_custom_call.1} parent=1 // loop_footer
      %s25 = sadd.s32 1, %s21
    $region7: #{tpu_custom_call.1} parent=1 // loop_footer_branch
      %20 = sbr.rel target = $region3
    $region8: #{tpu_custom_call.1} parent=1 // loop_exit
      _
    %939 = vsyncpa [#allocation6], 1
    %s940 = scalar_lea.sflag [#allocation6], 1
    %941 = vsyncpa %s940, 1
    %942 = vsyncpa [#allocation9], 1
    %s943 = scalar_lea.sflag [#allocation9], 1
    %944 = vsyncpa %s943, 1
    %945 = vsyncpa [#allocation12], 1
    %s946 = scalar_lea.sflag [#allocation12], 1
    %947 = vsyncpa %s946, 1
    %948 = vsyncpa [#allocation7], 1
    %s949 = scalar_lea.sflag [#allocation7], 1
    %950 = vsyncpa %s949, 1

</llo_original>
